<compile_context>
chip_gen: v5e
topology: v5e:2x2
jax: 0.10.0
libtpu: 0.0.40
codegen_flags: <defaults>
</compile_context>

<pallas_src>
import math

import numpy as np
import jax
import jax.numpy as jnp
from jax import lax
from jax.experimental import pallas as pl
from jax.experimental.pallas import tpu as pltpu


def critic_kernel(xslab_ref, aux_ref, w1_ref, b1_ref, w2_ref, b2_ref,
                  w3p_ref, w3aux_ref, out_ref):
    """One grid step == one chunk of BC batch elements packed into lanes (L = BC*A).

    xslab_ref : (1, (T-1)*F, L)  bf16  raw x[:, :, 1:, :] slab, rows ordered (time, feat)
    aux_ref   : (1, 2, L)        f32   row0 = w0 (= x[:, 0, 0, :]), row1 = action[:, :-1]
    w1_ref    : (ST*C1, (T-1)*F) bf16  block-diagonal conv1 weight, rows (t, c1)
    b1_ref    : (ST*C1, 1)       f32
    w2_ref    : (C2, ST*C1)      bf16  conv2 weight, taps folded into K, cols (t, c1)
    b2_ref    : (C2, 1)          f32
    w3p_ref   : (C2, L)          f32   layer3 weights for phi2 channels, lane-tiled
    w3aux_ref : (2, L)           f32   layer3 weights for (w0, action) channels, lane-tiled
    out_ref   : (1, 1, L)        f32   per-lane weighted channel sum u
    """
    # conv1 (+ReLU): single block-diagonal MXU dot yields all ST output time positions,
    # already stacked along sublanes in (t, c1) order; bias added once.
    phi1 = jnp.maximum(
        jnp.dot(w1_ref[...], xslab_ref[0],
                preferred_element_type=jnp.float32) + b1_ref[...], 0.0)      # (ST*C1, L)

    # conv2 (+ReLU): single dot, contraction over (t, c1).
    phi2 = jnp.maximum(
        jnp.dot(w2_ref[...], phi1.astype(jnp.bfloat16),
                preferred_element_type=jnp.float32) + b2_ref[...], 0.0)      # (C2, L)

    # layer3 (partial): per-lane weighted channel sum (VPU mul + sublane reduce).
    # The per-batch sum over the A asset lanes and the +b3 are done by the caller.
    u = jnp.sum(w3p_ref[...] * phi2, axis=0, keepdims=True)                  # (1, L)
    u = u + jnp.sum(w3aux_ref[...] * aux_ref[0], axis=0, keepdims=True)      # (1, L)
    out_ref[...] = u[None].astype(out_ref.dtype)                             # (1, 1, L)


def deterministic_critic_forward(x, action, params, *, lane_target=2048):
    """x: (B, F, T, A); action: (B, A+1); params = (w1, b1, w2, b2, w3, b3) in PyTorch
    layouts (Conv2d OIHW, Linear (1, (h1+2)*A)).  Returns Q of shape (B, 1), f32."""
    B, F, T, A = x.shape
    ST = T - 3
    w1, b1, w2, b2, w3, b3 = params
    C1, C2 = w1.shape[0], w2.shape[0]
    KX = (T - 1) * F

    # --- Batch chunking: BC elements per grid step; L = BC*A made a multiple of 128 so
    # every load and the output store are lane-dense.  No forced multi-chunk split for
    # tiny batches.
    bc_align = 128 // math.gcd(A, 128)          # smallest BC making L % 128 == 0
    bc_cap = max(bc_align, (max(1, lane_target // A) // bc_align) * bc_align)
    BC = min(bc_cap, pl.cdiv(B, bc_align) * bc_align)
    num_chunks = pl.cdiv(B, BC)
    Bpad = num_chunks * BC
    L = BC * A

    xf = x.astype(jnp.float32)
    af = action.astype(jnp.float32)
    if Bpad != B:
        xf = jnp.pad(xf, ((0, Bpad - B), (0, 0), (0, 0), (0, 0)))
        af = jnp.pad(af, ((0, Bpad - B), (0, 0)))

    # --- Raw x slab (no im2col): rows ordered (time, feature) over x[:, :, 1:, :],
    # lanes ordered (batch, asset).  bf16 MXU operand; accumulation stays f32 in-kernel.
    xs = xf[:, :, 1:, :].transpose(0, 2, 1, 3)                    # (Bpad, T-1, F, A)
    xslab = (xs.reshape(num_chunks, BC, KX, A)
               .transpose(0, 2, 1, 3)
               .reshape(num_chunks, KX, L)
               .astype(jnp.bfloat16))

    w0 = xf[:, 0, 0, :]                                           # (Bpad, A)
    act = af[:, :A]                                               # action[:, :-1]
    aux = jnp.stack([w0, act], axis=1)                            # (Bpad, 2, A)
    aux = (aux.reshape(num_chunks, BC, 2, A)
              .transpose(0, 2, 1, 3)
              .reshape(num_chunks, 2, L))

    # --- Weights: conv1 becomes one block-diagonal matrix (all output-time taps folded
    # into K); conv2 taps folded into K; layer3 weights lane-tiled (tiny, grid-invariant).
    w1_dtf = (w1.reshape(C1, F, 3).transpose(0, 2, 1)
                .reshape(C1, 3 * F).astype(jnp.float32))           # cols (dt, f)
    w1big = jnp.zeros((ST * C1, KX), jnp.float32)
    for t in range(ST):
        w1big = w1big.at[t * C1:(t + 1) * C1, t * F:(t + 3) * F].set(w1_dtf)
    w1big = w1big.astype(jnp.bfloat16)
    b1big = jnp.tile(b1.astype(jnp.float32), ST).reshape(ST * C1, 1)

    w2k = (w2.reshape(C2, C1, ST).transpose(0, 2, 1)
             .reshape(C2, ST * C1).astype(jnp.bfloat16))           # cols (t, c1)
    b2k = b2.reshape(C2, 1).astype(jnp.float32)

    w3r = w3.reshape(C2 + 2, A).astype(jnp.float32)                # (channel, asset)
    w3p_t = jnp.tile(w3r[:C2], (1, BC))                            # (C2, L)
    w3aux_t = jnp.tile(w3r[C2:], (1, BC))                          # (2, L)

    def full_spec(arr):
        nd = arr.ndim
        return pl.BlockSpec(arr.shape, lambda c, _nd=nd: (0,) * _nd)

    # Advisory cost hint + VMEM sizing (only raise the scoped limit when needed).
    per_step_bytes = KX * L * 2 + 2 * L * 4 + L * 4                # xslab + aux + out
    weight_bytes = ((ST * C1 * KX + C2 * ST * C1) * 2
                    + (ST * C1 + C2) * 4 + (C2 + 2) * L * 4)
    flops_step = 2 * L * (ST * C1) * KX + 2 * L * C2 * (ST * C1) + 4 * L * (C2 + 2)
    cost = pl.CostEstimate(flops=int(num_chunks * flops_step), transcendentals=0,
                           bytes_accessed=int(num_chunks * per_step_bytes + weight_bytes))

    vmem_est = 2 * per_step_bytes + weight_bytes + (ST * C1 + C2 + 4) * L * 4
    vmem_limit = (int(min(64 * 2**20, 2 * vmem_est))
                  if 2 * vmem_est > 14 * 2**20 else None)

    out = pl.pallas_call(
        critic_kernel,
        out_shape=jax.ShapeDtypeStruct((num_chunks, 1, L), jnp.float32),
        grid=(num_chunks,),
        in_specs=[
            pl.BlockSpec((1, KX, L), lambda c: (c, 0, 0)),
            pl.BlockSpec((1, 2, L), lambda c: (c, 0, 0)),
            full_spec(w1big), full_spec(b1big),
            full_spec(w2k), full_spec(b2k),
            full_spec(w3p_t), full_spec(w3aux_t),
        ],
        out_specs=pl.BlockSpec((1, 1, L), lambda c: (c, 0, 0)),
        compiler_params=pltpu.CompilerParams(
            dimension_semantics=("parallel",),
            vmem_limit_bytes=vmem_limit),
        cost_estimate=cost,
    )(xslab, aux, w1big, b1big, w2k, b2k, w3p_t, w3aux_t)

    # Final per-batch sum over the A asset lanes + bias: tiny (Bpad, A) reduction in XLA
    # (replaces the quadratic seg ones-matrix matmul).  Padded rows are sliced off.
    q = out.reshape(Bpad, A).sum(axis=1, keepdims=True) + b3.reshape(1, 1).astype(jnp.float32)
    return q[:B]


def reference_forward(x, action, params):
    """Pure-JAX f32 reference mirroring the PyTorch forward (NCHW convs + Linear)."""
    w1, b1, w2, b2, w3, b3 = params
    dn = ('NCHW', 'OIHW', 'NCHW')
    st = x.shape[2] - 3
    act = action[:, None, None, :-1]
    w0 = x[:, :1, :1, :]
    xs = x[:, :, 1:, :]
    phi1 = jax.nn.relu(lax.conv_general_dilated(xs, w1, (1, 1), 'VALID',
                                                dimension_numbers=dn)
                       + b1.reshape(1, -1, 1, 1))
    phi2 = jax.nn.relu(lax.conv_general_dilated(phi1, w2, (st, 1), 'VALID',
                                                dimension_numbers=dn)
                       + b2.reshape(1, -1, 1, 1))
    h = jnp.concatenate([phi2, w0, act], axis=1)                   # (B, h1+2, 1, A)
    hflat = h.reshape(x.shape[0], -1)
    return hflat @ w3.T + b3[None, :]


if __name__ == "__main__":
    key = jax.random.PRNGKey(0)
    # state_dim = (features, window, assets); window_length = 5 -> stride_time = 2
    B, F, T, A = 2, 4, 5, 16
    action_dim = A + 1
    h2, h1 = 16, 32            # conv1 out, conv2 out channels (as in the module)
    st = T - 3

    ks = jax.random.split(key, 8)
    x = jax.random.normal(ks[0], (B, F, T, A), jnp.float32)
    action = jax.random.normal(ks[1], (B, action_dim), jnp.float32)
    w1 = jax.random.normal(ks[2], (h2, F, 3, 1), jnp.float32) * 0.1
    b1 = jax.random.normal(ks[3], (h2,), jnp.float32) * 0.1
    w2 = jax.random.normal(ks[4], (h1, h2, st, 1), jnp.float32) * 0.1
    b2 = jax.random.normal(ks[5], (h1,), jnp.float32) * 0.1
    w3 = jax.random.normal(ks[6], (1, (h1 + 2) * A), jnp.float32) * 0.1
    b3 = jax.random.normal(ks[7], (1,), jnp.float32) * 0.1
    params = (w1, b1, w2, b2, w3, b3)

    out = deterministic_critic_forward(x, action, params)
    out = jax.block_until_ready(out)

    ref = reference_forward(x, action, params)
    assert out.shape == (B, 1)
    # Tolerance loosened vs the all-f32 version because the conv path uses bf16 MXU
    # operands (f32 accumulation); the aux (w0, action) path stays f32.
    np.testing.assert_allclose(np.asarray(out), np.asarray(ref), atol=5e-2, rtol=5e-2)
    print("KERNEL_OK")
</pallas_src>

<mosaic_0001>
module attributes {stable_mosaic.version = 11 : i64} {
  func.func @critic_kernel(%arg0: i32, %arg1: memref<1x16x128xbf16, #tpu.memory_space<vmem>>, %arg2: memref<1x2x128xf32, #tpu.memory_space<vmem>>, %arg3: memref<32x16xbf16, #tpu.memory_space<vmem>>, %arg4: memref<32x1xf32, #tpu.memory_space<vmem>>, %arg5: memref<32x32xbf16, #tpu.memory_space<vmem>>, %arg6: memref<32x1xf32, #tpu.memory_space<vmem>>, %arg7: memref<32x128xf32, #tpu.memory_space<vmem>>, %arg8: memref<2x128xf32, #tpu.memory_space<vmem>>, %arg9: memref<1x1x128xf32, #tpu.memory_space<vmem>>) attributes {dimension_semantics = [#tpu.dimension_semantics<parallel>], iteration_bounds = array<i64: 1>, scalar_prefetch = 0 : i64, scratch_operands = 0 : i64, tpu.core_type = #tpu.core_type<tc>, window_params = [{transform_indices = @transform_0, window_bounds = array<i64: 1, 16, 128>}, {transform_indices = @transform_1, window_bounds = array<i64: 1, 2, 128>}, {pipeline_mode = #tpu.pipeline_mode<synchronous>, transform_indices = @transform_2, window_bounds = array<i64: 32, 16>}, {pipeline_mode = #tpu.pipeline_mode<synchronous>, transform_indices = @transform_3, window_bounds = array<i64: 32, 1>}, {pipeline_mode = #tpu.pipeline_mode<synchronous>, transform_indices = @transform_4, window_bounds = array<i64: 32, 32>}, {pipeline_mode = #tpu.pipeline_mode<synchronous>, transform_indices = @transform_5, window_bounds = array<i64: 32, 1>}, {pipeline_mode = #tpu.pipeline_mode<synchronous>, transform_indices = @transform_6, window_bounds = array<i64: 32, 128>}, {pipeline_mode = #tpu.pipeline_mode<synchronous>, transform_indices = @transform_7, window_bounds = array<i64: 2, 128>}, {transform_indices = @transform_8, window_bounds = array<i64: 1, 1, 128>}]} {
    %c0 = arith.constant 0 : index
    %c0_0 = arith.constant 0 : index
    %0 = vector.load %arg3[%c0, %c0_0] : memref<32x16xbf16, #tpu.memory_space<vmem>>, vector<32x16xbf16>
    %c0_1 = arith.constant 0 : index
    %c0_2 = arith.constant 0 : index
    %c0_3 = arith.constant 0 : index
    %1 = vector.load %arg1[%c0_1, %c0_2, %c0_3] : memref<1x16x128xbf16, #tpu.memory_space<vmem>>, vector<1x16x128xbf16>
    %2 = vector.shape_cast %1 : vector<1x16x128xbf16> to vector<16x128xbf16>
    %cst = arith.constant dense<0.000000e+00> : vector<32x128xf32>
    %3 = tpu.matmul %0, %2, %cst {dimension_numbers = #tpu.dot_dimension_numbers<[1], [0], [0], [1], [0, 0, 1, 1], [], []>} : vector<32x16xbf16>, vector<16x128xbf16>, vector<32x128xf32> -> vector<32x128xf32>
    %c0_4 = arith.constant 0 : index
    %c0_5 = arith.constant 0 : index
    %4 = vector.load %arg4[%c0_4, %c0_5] : memref<32x1xf32, #tpu.memory_space<vmem>>, vector<32x1xf32>
    %5 = vector.broadcast %4 : vector<32x1xf32> to vector<32x128xf32>
    %6 = arith.addf %3, %5 : vector<32x128xf32>
    %cst_6 = arith.constant 0.000000e+00 : f32
    %7 = vector.broadcast %cst_6 : f32 to vector<32x128xf32>
    %8 = arith.maximumf %6, %7 : vector<32x128xf32>
    %c0_7 = arith.constant 0 : index
    %c0_8 = arith.constant 0 : index
    %9 = vector.load %arg5[%c0_7, %c0_8] : memref<32x32xbf16, #tpu.memory_space<vmem>>, vector<32x32xbf16>
    %10 = arith.truncf %8 : vector<32x128xf32> to vector<32x128xbf16>
    %cst_9 = arith.constant dense<0.000000e+00> : vector<32x128xf32>
    %11 = tpu.matmul %9, %10, %cst_9 {dimension_numbers = #tpu.dot_dimension_numbers<[1], [0], [0], [1], [0, 0, 1, 1], [], []>} : vector<32x32xbf16>, vector<32x128xbf16>, vector<32x128xf32> -> vector<32x128xf32>
    %c0_10 = arith.constant 0 : index
    %c0_11 = arith.constant 0 : index
    %12 = vector.load %arg6[%c0_10, %c0_11] : memref<32x1xf32, #tpu.memory_space<vmem>>, vector<32x1xf32>
    %13 = vector.broadcast %12 : vector<32x1xf32> to vector<32x128xf32>
    %14 = arith.addf %11, %13 : vector<32x128xf32>
    %cst_12 = arith.constant 0.000000e+00 : f32
    %15 = vector.broadcast %cst_12 : f32 to vector<32x128xf32>
    %16 = arith.maximumf %14, %15 : vector<32x128xf32>
    %c0_13 = arith.constant 0 : index
    %c0_14 = arith.constant 0 : index
    %17 = vector.load %arg7[%c0_13, %c0_14] : memref<32x128xf32, #tpu.memory_space<vmem>>, vector<32x128xf32>
    %18 = arith.mulf %17, %16 : vector<32x128xf32>
    %cst_15 = arith.constant dense<0.000000e+00> : vector<128xf32>
    %19 = vector.multi_reduction <add>, %18, %cst_15 [0] : vector<32x128xf32> to vector<128xf32>
    %20 = vector.shape_cast %19 : vector<128xf32> to vector<1x128xf32>
    %c0_16 = arith.constant 0 : index
    %c0_17 = arith.constant 0 : index
    %21 = vector.load %arg8[%c0_16, %c0_17] : memref<2x128xf32, #tpu.memory_space<vmem>>, vector<2x128xf32>
    %c0_18 = arith.constant 0 : index
    %c0_19 = arith.constant 0 : index
    %c0_20 = arith.constant 0 : index
    %22 = vector.load %arg2[%c0_18, %c0_19, %c0_20] : memref<1x2x128xf32, #tpu.memory_space<vmem>>, vector<1x2x128xf32>
    %23 = vector.shape_cast %22 : vector<1x2x128xf32> to vector<2x128xf32>
    %24 = arith.mulf %21, %23 : vector<2x128xf32>
    %cst_21 = arith.constant dense<0.000000e+00> : vector<128xf32>
    %25 = vector.multi_reduction <add>, %24, %cst_21 [0] : vector<2x128xf32> to vector<128xf32>
    %26 = vector.shape_cast %25 : vector<128xf32> to vector<1x128xf32>
    %27 = arith.addf %20, %26 : vector<1x128xf32>
    %28 = vector.shape_cast %27 : vector<1x128xf32> to vector<1x1x128xf32>
    %c0_22 = arith.constant 0 : index
    %c0_23 = arith.constant 0 : index
    %c0_24 = arith.constant 0 : index
    %29 = vector.load %arg9[%c0_22, %c0_23, %c0_24] : memref<1x1x128xf32, #tpu.memory_space<vmem>>, vector<1x1x128xf32>
    tpu.vector_store %arg9[%c0_22, %c0_23, %c0_24], %28 {strides = array<i32>} : memref<1x1x128xf32, #tpu.memory_space<vmem>>, vector<1x1x128xf32>,
    return
  }
  func.func @transform_0(%arg0: i32) -> (i32, i32, i32) {
    %c0_i32 = arith.constant 0 : i32
    %c0_i32_0 = arith.constant 0 : i32
    %c0_i32_1 = arith.constant 0 : i32
    return %arg0, %c0_i32, %c0_i32_0 : i32, i32, i32
  }
  func.func @transform_1(%arg0: i32) -> (i32, i32, i32) {
    %c0_i32 = arith.constant 0 : i32
    %c0_i32_0 = arith.constant 0 : i32
    %c0_i32_1 = arith.constant 0 : i32
    return %arg0, %c0_i32, %c0_i32_0 : i32, i32, i32
  }
  func.func @transform_2(%arg0: i32) -> (i32, i32) {
    %c0_i32 = arith.constant 0 : i32
    %c0_i32_0 = arith.constant 0 : i32
    %c0_i32_1 = arith.constant 0 : i32
    return %c0_i32, %c0_i32_0 : i32, i32
  }
  func.func @transform_3(%arg0: i32) -> (i32, i32) {
    %c0_i32 = arith.constant 0 : i32
    %c0_i32_0 = arith.constant 0 : i32
    %c0_i32_1 = arith.constant 0 : i32
    return %c0_i32, %c0_i32_0 : i32, i32
  }
  func.func @transform_4(%arg0: i32) -> (i32, i32) {
    %c0_i32 = arith.constant 0 : i32
    %c0_i32_0 = arith.constant 0 : i32
    %c0_i32_1 = arith.constant 0 : i32
    return %c0_i32, %c0_i32_0 : i32, i32
  }
  func.func @transform_5(%arg0: i32) -> (i32, i32) {
    %c0_i32 = arith.constant 0 : i32
    %c0_i32_0 = arith.constant 0 : i32
    %c0_i32_1 = arith.constant 0 : i32
    return %c0_i32, %c0_i32_0 : i32, i32
  }
  func.func @transform_6(%arg0: i32) -> (i32, i32) {
    %c0_i32 = arith.constant 0 : i32
    %c0_i32_0 = arith.constant 0 : i32
    %c0_i32_1 = arith.constant 0 : i32
    return %c0_i32, %c0_i32_0 : i32, i32
  }
  func.func @transform_7(%arg0: i32) -> (i32, i32) {
    %c0_i32 = arith.constant 0 : i32
    %c0_i32_0 = arith.constant 0 : i32
    %c0_i32_1 = arith.constant 0 : i32
    return %c0_i32, %c0_i32_0 : i32, i32
  }
  func.func @transform_8(%arg0: i32) -> (i32, i32, i32) {
    %c0_i32 = arith.constant 0 : i32
    %c0_i32_0 = arith.constant 0 : i32
    %c0_i32_1 = arith.constant 0 : i32
    return %arg0, %c0_i32, %c0_i32_0 : i32, i32, i32
  }
}

</mosaic_0001>

<llo_original>
// kernel: tpu_custom_call.1
$region0: #{tpu_custom_call.1}
  #allocation0 [shape = 'u32[]', space=smem, size = 0x4, offset = 0x4, fixed_abs, tag = 'smem constant byte address 0x4 - core index']
  #allocation1 [shape = 'u32[72,128]{1,0:T(1,128)}', space=vmem, size = 0x9000, scoped, tag = 'internal scratch']
  %s0 = inlined_call_operand.vmem [shape: bf16[1,16,128], index: 0, kind: input, shape index: {}]
  %s1 = inlined_call_operand.vmem [shape: f32[1,2,128], index: 1, kind: input, shape index: {}]
  %s2 = inlined_call_operand.vmem [shape: bf16[32,16], index: 2, kind: input, shape index: {}]
  %s3 = inlined_call_operand.vmem [shape: f32[32,1], index: 3, kind: input, shape index: {}]
  %s4 = inlined_call_operand.vmem [shape: bf16[32,32], index: 4, kind: input, shape index: {}]
  %s5 = inlined_call_operand.vmem [shape: f32[32,1], index: 5, kind: input, shape index: {}]
  %s6 = inlined_call_operand.vmem [shape: f32[32,128], index: 6, kind: input, shape index: {}]
  %s7 = inlined_call_operand.vmem [shape: f32[2,128], index: 7, kind: input, shape index: {}]
  %s8 = inlined_call_operand.hbm [shape: f32[1,1,128], index: 8, kind: output, shape index: {}]
  %s9 = sld [smem:[#allocation0]]
  $region42: #{tpu_custom_call.1} parent=0
    _
  %s11 = ssub.s32 1, %s9
  %s12 = scalar_select 0, %s11, %s9
  $region1: #{tpu_custom_call.1} parent=0
    #allocation2 [shape = 'u8[512]{0}', space=vmem, size = 0x400, scoped, tag = 'output window, operand 0, single buffered']
    #allocation3 [shape = 's32[1]{0}', space=sflag, size = 0x4, scoped, tag = 'scoped memory for tpu_custom_call.1']
    %13 = vsyncpa [#allocation3], 0
    // Predicated region
    $region2: #{tpu_custom_call.1} parent=1 // pred_check
      _
    $region3: #{tpu_custom_call.1} parent=1 // pred_check_branch
      %15 = sbr.rel (0) target = $region5
    $region4: #{tpu_custom_call.1} parent=1 // pred_region
      _
    $region5: #{tpu_custom_call.1} parent=1 // pred_fallthru
      _
    // Predicated region
    $region6: #{tpu_custom_call.1} parent=1 // pred_check
      _
    $region7: #{tpu_custom_call.1} parent=1 // pred_check_branch
      %17 = sbr.rel (0) target = $region9
    $region8: #{tpu_custom_call.1} parent=1 // pred_region
      _
    $region9: #{tpu_custom_call.1} parent=1 // pred_fallthru
      _
    // Predicated region
    $region10: #{tpu_custom_call.1} parent=1 // pred_check
      _
    $region11: #{tpu_custom_call.1} parent=1 // pred_check_branch
      %19 = sbr.rel (0) target = $region13
    $region12: #{tpu_custom_call.1} parent=1 // pred_region
      _
    $region13: #{tpu_custom_call.1} parent=1 // pred_fallthru
      _
    // Predicated region
    $region14: #{tpu_custom_call.1} parent=1 // pred_check
      _
    $region15: #{tpu_custom_call.1} parent=1 // pred_check_branch
      %21 = sbr.rel (0) target = $region17
    $region16: #{tpu_custom_call.1} parent=1 // pred_region
      _
    $region17: #{tpu_custom_call.1} parent=1 // pred_fallthru
      _
    // Predicated region
    $region18: #{tpu_custom_call.1} parent=1 // pred_check
      _
    $region19: #{tpu_custom_call.1} parent=1 // pred_check_branch
      %23 = sbr.rel (0) target = $region21
    $region20: #{tpu_custom_call.1} parent=1 // pred_region
      _
    $region21: #{tpu_custom_call.1} parent=1 // pred_fallthru
      _
    // Predicated region
    $region22: #{tpu_custom_call.1} parent=1 // pred_check
      _
    $region23: #{tpu_custom_call.1} parent=1 // pred_check_branch
      %25 = sbr.rel (0) target = $region25
    $region24: #{tpu_custom_call.1} parent=1 // pred_region
      _
    $region25: #{tpu_custom_call.1} parent=1 // pred_fallthru
      _
    // Predicated region
    $region26: #{tpu_custom_call.1} parent=1 // pred_check
      _
    $region27: #{tpu_custom_call.1} parent=1 // pred_check_branch
      %27 = sbr.rel (0) target = $region29
    $region28: #{tpu_custom_call.1} parent=1 // pred_region
      _
    $region29: #{tpu_custom_call.1} parent=1 // pred_fallthru
      _
    // Predicated region
    $region30: #{tpu_custom_call.1} parent=1 // pred_check
      _
    $region31: #{tpu_custom_call.1} parent=1 // pred_check_branch
      %29 = sbr.rel (0) target = $region33
    $region32: #{tpu_custom_call.1} parent=1 // pred_region
      _
    $region33: #{tpu_custom_call.1} parent=1 // pred_fallthru
      _
    %v31 = vld [vmem:[%s2] sm:$0xf]
    %v32 = vld [vmem:[%s2 + $0x4] sm:$0xf]
    %v33 = vld [vmem:[%s2 + $0x8] sm:$0xf]
    %v34 = vld [vmem:[%s2 + $0xc] sm:$0xf]
    %v35 = vld [vmem:[%s0] sm:$0xf]
    %v36 = vld [vmem:[%s0 + $0x4] sm:$0xf]
    %v37 = vld [vmem:[%s3] sm:$0xff]
    %v38 = vld [vmem:[%s3 + $0x8] sm:$0xff]
    %v39 = vld [vmem:[%s3 + $0x10] sm:$0xff]
    %v40 = vld [vmem:[%s3 + $0x18] sm:$0xff]
    %42 = vset.pattern.permute.xlu0 0
    %43 = vperm.xlu0 %42, %v37
    %v44 = vpop.permute.xlu0 %43
    %47 = vset.pattern.permute.xlu0 0
    %48 = vperm.xlu0 %47, %v38
    %v49 = vpop.permute.xlu0 %48
    %52 = vset.pattern.permute.xlu0 0
    %53 = vperm.xlu0 %52, %v39
    %v54 = vpop.permute.xlu0 %53
    %57 = vset.pattern.permute.xlu0 0
    %58 = vperm.xlu0 %57, %v40
    %v59 = vpop.permute.xlu0 %58
    %v65 = vunpack.c.l.b16 %v31
    %v66 = vunpack.c.l.b16 %v32
    %v67 = vunpack.c.l.b16 %v33
    %v68 = vunpack.c.l.b16 %v34
    %v69 = vpack.c.b16 %v66, %v65
    %v70 = vpack.c.b16 %v68, %v67
    %v73 = vunpack.c.l.b16 %v35
    %v74 = vunpack.c.l.b16 %v36
    %v75 = vpack.c.b16 %v74, %v73
    %vm77 = vcmask 130048
    %v79 = vsel %vm77, %v69, 0
    %v82 = vsel %vm77, %v70, 0
    %84 = vmatpush.bf16.msra.mxu0 0
    %85 = vmatpush.bf16.msra.mxu0 0
    %86 = vmatpush.bf16.msra.mxu0 0
    %87 = vmatpush.bf16.msra.mxu0 0
    %88 = vmatpush.bf16.msra.mxu0 0
    %89 = vmatpush.bf16.msra.mxu0 0
    %90 = vmatpush.bf16.msra.mxu0 0
    %91 = vmatpush.bf16.msra.mxu0 %v75
    %92 = vmatmul.bf16.gmra.mxu0 %v79
    %v93 = vpop.f32.mrf.mxu0
    %v94 = vadd.f32 %v44, %v93
    %v95 = vpop.f32.mrf.mxu0
    %v96 = vadd.f32 %v49, %v95
    %97 = vmatmul.bf16.gmra.mxu0 %v82
    %v98 = vpop.f32.mrf.mxu0
    %v99 = vadd.f32 %v54, %v98
    %v100 = vpop.f32.mrf.mxu0
    %v101 = vadd.f32 %v59, %v100
    %102 = vdwg.mxu0
    %v103 = vmax.f32 %v94, 0.0
    %v104 = vmax.f32 %v96, 0.0
    %v105 = vmax.f32 %v99, 0.0
    %v106 = vmax.f32 %v101, 0.0
    %v107 = vld [vmem:[%s4] sm:$0xf]
    %v108 = vld [vmem:[%s4 + $0x4] sm:$0xf]
    %v109 = vld [vmem:[%s4 + $0x8] sm:$0xf]
    %v110 = vld [vmem:[%s4 + $0xc] sm:$0xf]
    %v111 = vpack.c.bf16 %v104, %v103
    %v112 = vpack.c.bf16 %v106, %v105
    %v113 = vld [vmem:[%s5] sm:$0xff]
    %v114 = vld [vmem:[%s5 + $0x8] sm:$0xff]
    %v115 = vld [vmem:[%s5 + $0x10] sm:$0xff]
    %v116 = vld [vmem:[%s5 + $0x18] sm:$0xff]
    %118 = vset.pattern.permute.xlu0 0
    %119 = vperm.xlu0 %118, %v113
    %v120 = vpop.permute.xlu0 %119
    %123 = vset.pattern.permute.xlu0 0
    %124 = vperm.xlu0 %123, %v114
    %v125 = vpop.permute.xlu0 %124
    %128 = vset.pattern.permute.xlu0 0
    %129 = vperm.xlu0 %128, %v115
    %v130 = vpop.permute.xlu0 %129
    %133 = vset.pattern.permute.xlu0 0
    %134 = vperm.xlu0 %133, %v116
    %v135 = vpop.permute.xlu0 %134
    %v141 = vunpack.c.l.b16 %v107
    %v142 = vunpack.c.l.b16 %v108
    %v143 = vunpack.c.l.b16 %v109
    %v144 = vunpack.c.l.b16 %v110
    %v145 = vpack.c.b16 %v142, %v141
    %v146 = vpack.c.b16 %v144, %v143
    %vm147 = vcmask 261120
    %v149 = vsel %vm147, %v145, 0
    %v152 = vsel %vm147, %v146, 0
    %154 = vmatpush.bf16.msra.mxu0 0
    %155 = vmatpush.bf16.msra.mxu0 0
    %156 = vmatpush.bf16.msra.mxu0 0
    %157 = vmatpush.bf16.msra.mxu0 0
    %158 = vmatpush.bf16.msra.mxu0 0
    %159 = vmatpush.bf16.msra.mxu0 0
    %160 = vmatpush.bf16.msra.mxu0 %v112
    %161 = vmatpush.bf16.msra.mxu0 %v111
    %162 = vmatmul.bf16.gmra.mxu0 %v149
    %v163 = vpop.f32.mrf.mxu0
    %v164 = vadd.f32 %v120, %v163
    %v165 = vpop.f32.mrf.mxu0
    %v166 = vadd.f32 %v125, %v165
    %167 = vmatmul.bf16.gmra.mxu0 %v152
    %v168 = vpop.f32.mrf.mxu0
    %v169 = vadd.f32 %v130, %v168
    %v170 = vpop.f32.mrf.mxu0
    %v171 = vadd.f32 %v135, %v170
    %172 = vdwg.mxu0
    %v173 = vmax.f32 %v164, 0.0
    %v174 = vmax.f32 %v166, 0.0
    %v175 = vmax.f32 %v169, 0.0
    %v176 = vmax.f32 %v171, 0.0
    %v177 = vld [vmem:[%s6] sm:$0xff]
    %v178 = vld [vmem:[%s6 + $0x8] sm:$0xff]
    %v179 = vld [vmem:[%s6 + $0x10] sm:$0xff]
    %v180 = vld [vmem:[%s6 + $0x18] sm:$0xff]
    %v181 = vmul.f32 %v177, %v173
    %v182 = vmul.f32 %v178, %v174
    %v183 = vmul.f32 %v179, %v175
    %v184 = vmul.f32 %v180, %v176
    %v185 = vadd.f32 %v181, %v182
    %v186 = vadd.f32 %v185, %v183
    %v187 = vadd.f32 %v186, %v184
    %v188 = vrot.slane %v187, 4
    %v189 = vadd.f32 %v187, %v188
    %v190 = vrot.slane %v189, 2
    %v191 = vadd.f32 %v189, %v190
    %v192 = vrot.slane %v191, 1
    %v193 = vadd.f32 %v191, %v192
    %v194 = vld [vmem:[%s7] sm:$0x3]
    %v195 = vld [vmem:[%s1] sm:$0x3]
    %v196 = vmul.f32 %v194, %v195
    %vm197 = vcmask 1041408
    %v198 = vsel %vm197, %v196, 0.0
    %v199 = vrot.slane %v198, 4
    %v200 = vadd.f32 %v198, %v199
    %v201 = vrot.slane %v200, 2
    %v202 = vadd.f32 %v200, %v201
    %v203 = vrot.slane %v202, 1
    %v204 = vadd.f32 %v202, %v203
    %v205 = vadd.f32 %v193, %v204
    %206 = vst [vmem:[#allocation2] sm:$0x1] %v205
    // Predicated region
    $region34: #{tpu_custom_call.1} parent=1 // pred_check
      _
    $region35: #{tpu_custom_call.1} parent=1 // pred_check_branch
      %208 = sbr.rel (0) target = $region37
    $region36: #{tpu_custom_call.1} parent=1 // pred_region
      %210 = vsyncadd [#allocation3], 0
      %s212 = sshll.u32 [#allocation2], 4
      %s213 = int_to_ptr.vmem [resolvable:$true] %s212
      %s214 = sshll.u32 %s8, 4
      %s215 = int_to_ptr.hbm [resolvable:$true] %s214
      %217 = dma.vmem_to_hbm [thread:$0]  %s213, 16, %s215, [#allocation3]
    $region37: #{tpu_custom_call.1} parent=1 // pred_fallthru
      _
    // Predicated region
    $region38: #{tpu_custom_call.1} parent=1 // pred_check
      _
    $region39: #{tpu_custom_call.1} parent=1 // pred_check_branch
      %219 = sbr.rel (0) target = $region41
    $region40: #{tpu_custom_call.1} parent=1 // pred_region
      %221 = dma.done [#allocation3], 16
    $region41: #{tpu_custom_call.1} parent=1 // pred_fallthru
      _
    %222 = vsyncpa [#allocation3], 1

</llo_original>
